<compile_context>
chip_gen: v5e
topology: v5e:2x2
jax: 0.10.0
libtpu: 0.0.40
codegen_flags: <defaults>
</compile_context>

<pallas_src>
import functools

import jax
import jax.numpy as jnp
from jax.experimental import pallas as pl
from jax.experimental.pallas import tpu as pltpu


def _decoder_kernel(compute_dtype, transpose_input, x_ref, *refs):
    """Whole MLP for one tile of nodes; all math node-last and lane-dense.

    refs = (w_0, b_0, ..., w_L, b_L, o_ref); weights are (out, in), biases
    (out, 1) f32.  Weights are tiny, fully resident and grid-invariant.
    """
    o_ref = refs[-1]
    wb_refs = refs[:-1]
    n_layers = len(wb_refs) // 2

    x = x_ref[...]                           # (d_in, tile_n) or (tile_n, d_in)
    if transpose_input:
        # Node-first tile -> node-last.  XLU work, hidden under DMA/MXU.
        x = x.T
    h = x.astype(compute_dtype)              # in-kernel MXU-operand cast (VPU slack)

    for i in range(n_layers):
        w_ref = wb_refs[2 * i]               # (d_out_i, d_in_i), PyTorch layout
        b_ref = wb_refs[2 * i + 1]           # (d_out_i, 1), f32
        acc = jnp.dot(w_ref[...], h,
                      preferred_element_type=jnp.float32)   # MXU, f32 accumulate
        acc = acc + b_ref[...]               # f32 bias add (VPU)
        if i < n_layers - 1:
            h = jnp.maximum(acc, 0.0).astype(compute_dtype)  # ReLU f32, recast for MXU
        else:
            h = acc                          # final layer: Identity
    o_ref[...] = h.astype(o_ref.dtype)       # lane-dense store (last dim = tile_n)


def _pick_tile_n(n, max_tile_n, min_steps):
    """Largest multiple of 128 <= max_tile_n that keeps >= min_steps grid steps
    (so each v7x TensorCore gets several pipelined steps); floor of 128."""
    tile = min(max_tile_n, max(128, 128 * (n // (min_steps * 128))))
    tile = max(128, (tile // 128) * 128)
    return tile


def _run_decoder(x_in, params, *, node_first_input, tile_n, compute_dtype,
                 min_steps):
    """Shared pallas_call builder.  Returns node-last output (d_out, n) f32."""
    if node_first_input:
        n, d_in = x_in.shape
    else:
        d_in, n = x_in.shape
    d_out = params[-1][0].shape[0]

    tile = _pick_tile_n(n, tile_n, min_steps)
    grid = (pl.cdiv(n, tile),)               # ragged last block handled by Pallas

    flat = []
    for w, b in params:
        flat.append(w.astype(compute_dtype))      # MXU operand dtype (tiny arrays)
        flat.append(b.astype(jnp.float32))        # bias add stays f32

    if node_first_input:
        x_spec = pl.BlockSpec((tile, d_in), lambda i: (i, 0))
    else:
        x_spec = pl.BlockSpec((d_in, tile), lambda i: (0, i))

    kernel = functools.partial(_decoder_kernel, compute_dtype, node_first_input)

    out_t = pl.pallas_call(
        kernel,
        out_shape=jax.ShapeDtypeStruct((d_out, n), jnp.float32),
        grid_spec=pltpu.PrefetchScalarGridSpec(
            num_scalar_prefetch=0,
            grid=grid,
            in_specs=[x_spec]
                    + [pl.BlockSpec(a.shape, lambda i: (0, 0)) for a in flat],
            out_specs=pl.BlockSpec((d_out, tile), lambda i: (0, i)),
        ),
        compiler_params=pltpu.CompilerParams(
            dimension_semantics=("parallel",)),
    )(x_in, *flat)
    return out_t


@functools.partial(jax.jit,
                   static_argnames=("tile_n", "compute_dtype", "min_steps"))
def decoder_forward_nodes_last(xt, params, *, tile_n=2048,
                               compute_dtype=jnp.bfloat16, min_steps=8):
    """Fast path: xt is node-last (nnode_in, num_nodes) -> (nnode_out, num_nodes).

    No pad, no slice, no cast and no transpose passes outside the kernel."""
    return _run_decoder(xt, params, node_first_input=False, tile_n=tile_n,
                        compute_dtype=compute_dtype, min_steps=min_steps)


@functools.partial(jax.jit,
                   static_argnames=("tile_n", "compute_dtype", "min_steps"))
def decoder_forward(x, params, *, tile_n=2048, compute_dtype=jnp.bfloat16,
                    min_steps=8):
    """PyTorch-layout interface: (num_nodes, nnode_in) -> (num_nodes, nnode_out).

    The input transpose is fused into the kernel; only the small (nnode_out, N)
    result is transposed here because the PyTorch interface demands node-first.
    Consumers that accept node-last output should use decoder_forward_nodes_last
    (or _run_decoder's node-last result) and skip this transpose entirely."""
    out_t = _run_decoder(x, params, node_first_input=True, tile_n=tile_n,
                         compute_dtype=compute_dtype, min_steps=min_steps)
    return out_t.T


def init_decoder_params(key, nnode_in, nnode_out, nmlp_layers, mlp_hidden_dim):
    """PyTorch-style Linear init (uniform +-1/sqrt(fan_in)).

    Weights are native PyTorch (out, in) layout; biases are (out, 1)."""
    sizes = [nnode_in] + [mlp_hidden_dim] * nmlp_layers + [nnode_out]
    params = []
    for i in range(len(sizes) - 1):
        fan_in, fan_out = sizes[i], sizes[i + 1]
        key, kw, kb = jax.random.split(key, 3)
        bound = 1.0 / (fan_in ** 0.5)
        w = jax.random.uniform(kw, (fan_out, fan_in), jnp.float32,
                               minval=-bound, maxval=bound)
        b = jax.random.uniform(kb, (fan_out, 1), jnp.float32,
                               minval=-bound, maxval=bound)
        params.append((w, b))
    return params


def decoder_reference(x, params):
    """Pure-JAX reference matching the PyTorch MLP semantics."""
    h = x
    for i, (w, b) in enumerate(params):
        h = h @ w.T + b[:, 0]
        if i < len(params) - 1:
            h = jnp.maximum(h, 0.0)
    return h


if __name__ == "__main__":
    # Module hyperparameters (small, consistent with the forward pass).
    nnode_in = 32
    nnode_out = 8
    nmlp_layers = 2
    mlp_hidden_dim = 32
    num_nodes = 1000          # deliberately NOT a multiple of 128 / tile_n

    key = jax.random.PRNGKey(0)
    key, kx = jax.random.split(key)
    x = jax.random.normal(kx, (num_nodes, nnode_in), jnp.float32)

    params = init_decoder_params(key, nnode_in, nnode_out, nmlp_layers,
                                 mlp_hidden_dim)

    ref = decoder_reference(x, params)

    # PyTorch-layout interface, exact f32 path: tight tolerance.
    out = jax.block_until_ready(
        decoder_forward(x, params, compute_dtype=jnp.float32))
    assert out.shape == (num_nodes, nnode_out)
    assert jnp.allclose(out, ref, atol=1e-5, rtol=1e-5), "f32 mismatch"

    # Node-last fast path (no transposes at all in production; the x.T here is
    # only to fabricate a node-last input for the check), exact f32.
    out_nl = jax.block_until_ready(
        decoder_forward_nodes_last(x.T, params, compute_dtype=jnp.float32))
    assert out_nl.shape == (nnode_out, num_nodes)
    assert jnp.allclose(out_nl, ref.T, atol=1e-5, rtol=1e-5), "f32 node-last mismatch"

    # Default bf16 MXU-operand path (recommended on v6e/v7x): looser tolerance
    # (hidden activations are downcast to bf16 between layers).
    out_bf16 = jax.block_until_ready(decoder_forward(x, params))
    assert out_bf16.shape == (num_nodes, nnode_out)
    assert jnp.allclose(out_bf16, ref, atol=1e-1, rtol=1e-1), "bf16 mismatch"

    print("KERNEL_OK")
</pallas_src>

<mosaic_0001>
module attributes {stable_mosaic.version = 11 : i64} {
  func.func @_decoder_kernel(%arg0: i32, %arg1: memref<128x32xf32, #tpu.memory_space<vmem>>, %arg2: memref<32x32xf32, #tpu.memory_space<vmem>>, %arg3: memref<32x1xf32, #tpu.memory_space<vmem>>, %arg4: memref<32x32xf32, #tpu.memory_space<vmem>>, %arg5: memref<32x1xf32, #tpu.memory_space<vmem>>, %arg6: memref<8x32xf32, #tpu.memory_space<vmem>>, %arg7: memref<8x1xf32, #tpu.memory_space<vmem>>, %arg8: memref<8x128xf32, #tpu.memory_space<vmem>>) attributes {dimension_semantics = [#tpu.dimension_semantics<parallel>], iteration_bounds = array<i64: 8>, scalar_prefetch = 0 : i64, scratch_operands = 0 : i64, tpu.core_type = #tpu.core_type<tc>, window_params = [{transform_indices = @transform_0, window_bounds = array<i64: 128, 32>}, {pipeline_mode = #tpu.pipeline_mode<synchronous>, transform_indices = @transform_1, window_bounds = array<i64: 32, 32>}, {pipeline_mode = #tpu.pipeline_mode<synchronous>, transform_indices = @transform_2, window_bounds = array<i64: 32, 1>}, {pipeline_mode = #tpu.pipeline_mode<synchronous>, transform_indices = @transform_3, window_bounds = array<i64: 32, 32>}, {pipeline_mode = #tpu.pipeline_mode<synchronous>, transform_indices = @transform_4, window_bounds = array<i64: 32, 1>}, {pipeline_mode = #tpu.pipeline_mode<synchronous>, transform_indices = @transform_5, window_bounds = array<i64: 8, 32>}, {pipeline_mode = #tpu.pipeline_mode<synchronous>, transform_indices = @transform_6, window_bounds = array<i64: 8, 1>}, {transform_indices = @transform_7, window_bounds = array<i64: 8, 128>}]} {
    %c0 = arith.constant 0 : index
    %c0_0 = arith.constant 0 : index
    %0 = vector.load %arg1[%c0, %c0_0] : memref<128x32xf32, #tpu.memory_space<vmem>>, vector<128x32xf32>
    %1 = tpu.transpose %0, [1, 0] : vector<128x32xf32> -> vector<32x128xf32>
    %c0_1 = arith.constant 0 : index
    %c0_2 = arith.constant 0 : index
    %2 = vector.load %arg2[%c0_1, %c0_2] : memref<32x32xf32, #tpu.memory_space<vmem>>, vector<32x32xf32>
    %cst = arith.constant dense<0.000000e+00> : vector<32x128xf32>
    %3 = tpu.matmul %2, %1, %cst {dimension_numbers = #tpu.dot_dimension_numbers<[1], [0], [0], [1], [0, 0, 1, 1], [], []>} : vector<32x32xf32>, vector<32x128xf32>, vector<32x128xf32> -> vector<32x128xf32>
    %c0_3 = arith.constant 0 : index
    %c0_4 = arith.constant 0 : index
    %4 = vector.load %arg3[%c0_3, %c0_4] : memref<32x1xf32, #tpu.memory_space<vmem>>, vector<32x1xf32>
    %5 = vector.broadcast %4 : vector<32x1xf32> to vector<32x128xf32>
    %6 = arith.addf %3, %5 : vector<32x128xf32>
    %cst_5 = arith.constant 0.000000e+00 : f32
    %7 = vector.broadcast %cst_5 : f32 to vector<32x128xf32>
    %8 = arith.maximumf %6, %7 : vector<32x128xf32>
    %c0_6 = arith.constant 0 : index
    %c0_7 = arith.constant 0 : index
    %9 = vector.load %arg4[%c0_6, %c0_7] : memref<32x32xf32, #tpu.memory_space<vmem>>, vector<32x32xf32>
    %cst_8 = arith.constant dense<0.000000e+00> : vector<32x128xf32>
    %10 = tpu.matmul %9, %8, %cst_8 {dimension_numbers = #tpu.dot_dimension_numbers<[1], [0], [0], [1], [0, 0, 1, 1], [], []>} : vector<32x32xf32>, vector<32x128xf32>, vector<32x128xf32> -> vector<32x128xf32>
    %c0_9 = arith.constant 0 : index
    %c0_10 = arith.constant 0 : index
    %11 = vector.load %arg5[%c0_9, %c0_10] : memref<32x1xf32, #tpu.memory_space<vmem>>, vector<32x1xf32>
    %12 = vector.broadcast %11 : vector<32x1xf32> to vector<32x128xf32>
    %13 = arith.addf %10, %12 : vector<32x128xf32>
    %cst_11 = arith.constant 0.000000e+00 : f32
    %14 = vector.broadcast %cst_11 : f32 to vector<32x128xf32>
    %15 = arith.maximumf %13, %14 : vector<32x128xf32>
    %c0_12 = arith.constant 0 : index
    %c0_13 = arith.constant 0 : index
    %16 = vector.load %arg6[%c0_12, %c0_13] : memref<8x32xf32, #tpu.memory_space<vmem>>, vector<8x32xf32>
    %cst_14 = arith.constant dense<0.000000e+00> : vector<8x128xf32>
    %17 = tpu.matmul %16, %15, %cst_14 {dimension_numbers = #tpu.dot_dimension_numbers<[1], [0], [0], [1], [0, 0, 1, 1], [], []>} : vector<8x32xf32>, vector<32x128xf32>, vector<8x128xf32> -> vector<8x128xf32>
    %c0_15 = arith.constant 0 : index
    %c0_16 = arith.constant 0 : index
    %18 = vector.load %arg7[%c0_15, %c0_16] : memref<8x1xf32, #tpu.memory_space<vmem>>, vector<8x1xf32>
    %19 = vector.broadcast %18 : vector<8x1xf32> to vector<8x128xf32>
    %20 = arith.addf %17, %19 : vector<8x128xf32>
    %c0_17 = arith.constant 0 : index
    %c0_18 = arith.constant 0 : index
    %21 = vector.load %arg8[%c0_17, %c0_18] : memref<8x128xf32, #tpu.memory_space<vmem>>, vector<8x128xf32>
    tpu.vector_store %arg8[%c0_17, %c0_18], %20 {strides = array<i32>} : memref<8x128xf32, #tpu.memory_space<vmem>>, vector<8x128xf32>,
    return
  }
  func.func @transform_0(%arg0: i32) -> (i32, i32) {
    %c0_i32 = arith.constant 0 : i32
    %c0_i32_0 = arith.constant 0 : i32
    return %arg0, %c0_i32 : i32, i32
  }
  func.func @transform_1(%arg0: i32) -> (i32, i32) {
    %c0_i32 = arith.constant 0 : i32
    %c0_i32_0 = arith.constant 0 : i32
    %c0_i32_1 = arith.constant 0 : i32
    return %c0_i32, %c0_i32_0 : i32, i32
  }
  func.func @transform_2(%arg0: i32) -> (i32, i32) {
    %c0_i32 = arith.constant 0 : i32
    %c0_i32_0 = arith.constant 0 : i32
    %c0_i32_1 = arith.constant 0 : i32
    return %c0_i32, %c0_i32_0 : i32, i32
  }
  func.func @transform_3(%arg0: i32) -> (i32, i32) {
    %c0_i32 = arith.constant 0 : i32
    %c0_i32_0 = arith.constant 0 : i32
    %c0_i32_1 = arith.constant 0 : i32
    return %c0_i32, %c0_i32_0 : i32, i32
  }
  func.func @transform_4(%arg0: i32) -> (i32, i32) {
    %c0_i32 = arith.constant 0 : i32
    %c0_i32_0 = arith.constant 0 : i32
    %c0_i32_1 = arith.constant 0 : i32
    return %c0_i32, %c0_i32_0 : i32, i32
  }
  func.func @transform_5(%arg0: i32) -> (i32, i32) {
    %c0_i32 = arith.constant 0 : i32
    %c0_i32_0 = arith.constant 0 : i32
    %c0_i32_1 = arith.constant 0 : i32
    return %c0_i32, %c0_i32_0 : i32, i32
  }
  func.func @transform_6(%arg0: i32) -> (i32, i32) {
    %c0_i32 = arith.constant 0 : i32
    %c0_i32_0 = arith.constant 0 : i32
    %c0_i32_1 = arith.constant 0 : i32
    return %c0_i32, %c0_i32_0 : i32, i32
  }
  func.func @transform_7(%arg0: i32) -> (i32, i32) {
    %c0_i32 = arith.constant 0 : i32
    %c0_i32_0 = arith.constant 0 : i32
    return %c0_i32, %arg0 : i32, i32
  }
}

</mosaic_0001>

<llo_original>
// kernel: decoder_forward.1
$region0: #{decoder_forward.1}
  #allocation0 [shape = 'u32[]', space=smem, size = 0x4, offset = 0x4, fixed_abs, tag = 'smem constant byte address 0x4 - core index']
  #allocation1 [shape = 'u32[72,128]{1,0:T(1,128)}', space=vmem, size = 0x9000, scoped, tag = 'internal scratch']
  %s0 = inlined_call_operand.vmem [shape: f32[1000,32], index: 0, kind: input, shape index: {}]
  %s1 = inlined_call_operand.vmem [shape: f32[32,32], index: 1, kind: input, shape index: {}]
  %s2 = inlined_call_operand.vmem [shape: f32[32,1], index: 2, kind: input, shape index: {}]
  %s3 = inlined_call_operand.vmem [shape: f32[32,32], index: 3, kind: input, shape index: {}]
  %s4 = inlined_call_operand.vmem [shape: f32[32,1], index: 4, kind: input, shape index: {}]
  %s5 = inlined_call_operand.vmem [shape: f32[8,32], index: 5, kind: input, shape index: {}]
  %s6 = inlined_call_operand.vmem [shape: f32[8,1], index: 6, kind: input, shape index: {}]
  %s7 = inlined_call_operand.hbm [shape: f32[8,1000], index: 7, kind: output, shape index: {}]
  %s8 = sld [smem:[#allocation0]]
  $region61: #{decoder_forward.1} parent=0
    _
  %s10 = ssub.s32 1, %s8
  %s11 = scalar_select 0, %s10, %s8
  $region1: #{decoder_forward.1} parent=0
    #allocation2 [shape = 'u8[8192]{0}', space=vmem, size = 0x2000, scoped, tag = 'output window, operand 0']
    #allocation3 [shape = 's32[2]{0}', space=sflag, size = 0x8, scoped, tag = 'scoped memory for decoder_forward.1']
    %12 = vsyncpa [#allocation3], 0
    %s13 = scalar_lea.sflag [#allocation3], 1
    %14 = vsyncpa %s13, 0
    loop: start=0, step=1, limit=10
    $region2: #{decoder_forward.1} parent=1 // loop_pre_header
      _
    $region3: #{decoder_forward.1} parent=1 // loop_header
      %s16 = sphi 0, %s20
      %p17 = scmp.ge.s32.totalorder %s16, 10
      %s26 = sphi 0, %s28
      %s29 = sphi 0, %s26
      %s30 = sphi 0, %s29
      %s46 = sphi 0, %s30
      %s50 = sphi 0, %s50
      %s52 = sphi 0, %s50
      %s53 = sphi 0, %s52
      %s67 = sphi 0, %s53
      %s71 = sphi 0, %s71
      %s73 = sphi 0, %s71
      %s74 = sphi 0, %s73
      %s88 = sphi 0, %s74
      %s92 = sphi 0, %s92
      %s94 = sphi 0, %s92
      %s95 = sphi 0, %s94
      %s109 = sphi 0, %s95
      %s113 = sphi 0, %s113
      %s115 = sphi 0, %s113
      %s116 = sphi 0, %s115
      %s130 = sphi 0, %s116
      %s134 = sphi 0, %s134
      %s136 = sphi 0, %s134
      %s137 = sphi 0, %s136
      %s151 = sphi 0, %s137
      %s155 = sphi 0, %s155
      %s157 = sphi 0, %s155
      %s158 = sphi 0, %s157
      %s172 = sphi 0, %s158
      %s178 = sphi 0, %s180
      %s181 = sphi 0, %s178
      %s182 = sphi 0, %s181
      %s198 = sphi 0, %s182
    $region4: #{decoder_forward.1} parent=1 // loop_header_branch
      %19 = sbr.rel (%p17) target = $region8
    $region5: #{decoder_forward.1} parent=1 // loop_body
      %s21 = ssub.s32 %s16, 1
      %s22 = ssub.s32 %s16, 2
      %s23 = sadd.s32 %s16, 1
      %s24 = ssub.s32 %s16, %s23
      %p25 = scmp.eq.s32.totalorder %s24, 0
      %s27 = sadd.s32 %s26, 1
      %s28 = scalar_select %p25, %s26, %s27
      %p31 = pneg %p25
      %p32 = scmp.eq.s32.totalorder %s16, 7
      %p33 = por %p31, %p32
      %p34 = scmp.ne.s32.totalorder %s26, %s29
      %p35 = scmp.eq.s32.totalorder %s16, 0
      %p36 = por %p34, %p35
      %p37 = scmp.ne.s32.totalorder %s26, %s29
      %p38 = scmp.eq.s32.totalorder %s21, 7
      %p39 = por %p37, %p38
      %p40 = scmp.ne.s32.totalorder %s29, %s30
      %p41 = scmp.eq.s32.totalorder %s21, 0
      %p42 = por %p40, %p41
      %p43 = scmp.ne.s32.totalorder %s29, %s30
      %p44 = scmp.eq.s32.totalorder %s22, 7
      %p45 = por %p43, %p44
      %p47 = scmp.ne.s32.totalorder %s30, %s46
      %p48 = scmp.eq.s32.totalorder %s22, 0
      %p49 = por %p47, %p48
      %s51 = sadd.s32 %s50, 1
      %p54 = scmp.eq.s32.totalorder %s16, 7
      %p55 = scmp.ne.s32.totalorder %s50, %s52
      %p56 = scmp.eq.s32.totalorder %s16, 0
      %p57 = por %p55, %p56
      %p58 = scmp.ne.s32.totalorder %s50, %s52
      %p59 = scmp.eq.s32.totalorder %s21, 7
      %p60 = por %p58, %p59
      %p61 = scmp.ne.s32.totalorder %s52, %s53
      %p62 = scmp.eq.s32.totalorder %s21, 0
      %p63 = por %p61, %p62
      %p64 = scmp.ne.s32.totalorder %s52, %s53
      %p65 = scmp.eq.s32.totalorder %s22, 7
      %p66 = por %p64, %p65
      %p68 = scmp.ne.s32.totalorder %s53, %s67
      %p69 = scmp.eq.s32.totalorder %s22, 0
      %p70 = por %p68, %p69
      %s72 = sadd.s32 %s71, 1
      %p75 = scmp.eq.s32.totalorder %s16, 7
      %p76 = scmp.ne.s32.totalorder %s71, %s73
      %p77 = scmp.eq.s32.totalorder %s16, 0
      %p78 = por %p76, %p77
      %p79 = scmp.ne.s32.totalorder %s71, %s73
      %p80 = scmp.eq.s32.totalorder %s21, 7
      %p81 = por %p79, %p80
      %p82 = scmp.ne.s32.totalorder %s73, %s74
      %p83 = scmp.eq.s32.totalorder %s21, 0
      %p84 = por %p82, %p83
      %p85 = scmp.ne.s32.totalorder %s73, %s74
      %p86 = scmp.eq.s32.totalorder %s22, 7
      %p87 = por %p85, %p86
      %p89 = scmp.ne.s32.totalorder %s74, %s88
      %p90 = scmp.eq.s32.totalorder %s22, 0
      %p91 = por %p89, %p90
      %s93 = sadd.s32 %s92, 1
      %p96 = scmp.eq.s32.totalorder %s16, 7
      %p97 = scmp.ne.s32.totalorder %s92, %s94
      %p98 = scmp.eq.s32.totalorder %s16, 0
      %p99 = por %p97, %p98
      %p100 = scmp.ne.s32.totalorder %s92, %s94
      %p101 = scmp.eq.s32.totalorder %s21, 7
      %p102 = por %p100, %p101
      %p103 = scmp.ne.s32.totalorder %s94, %s95
      %p104 = scmp.eq.s32.totalorder %s21, 0
      %p105 = por %p103, %p104
      %p106 = scmp.ne.s32.totalorder %s94, %s95
      %p107 = scmp.eq.s32.totalorder %s22, 7
      %p108 = por %p106, %p107
      %p110 = scmp.ne.s32.totalorder %s95, %s109
      %p111 = scmp.eq.s32.totalorder %s22, 0
      %p112 = por %p110, %p111
      %s114 = sadd.s32 %s113, 1
      %p117 = scmp.eq.s32.totalorder %s16, 7
      %p118 = scmp.ne.s32.totalorder %s113, %s115
      %p119 = scmp.eq.s32.totalorder %s16, 0
      %p120 = por %p118, %p119
      %p121 = scmp.ne.s32.totalorder %s113, %s115
      %p122 = scmp.eq.s32.totalorder %s21, 7
      %p123 = por %p121, %p122
      %p124 = scmp.ne.s32.totalorder %s115, %s116
      %p125 = scmp.eq.s32.totalorder %s21, 0
      %p126 = por %p124, %p125
      %p127 = scmp.ne.s32.totalorder %s115, %s116
      %p128 = scmp.eq.s32.totalorder %s22, 7
      %p129 = por %p127, %p128
      %p131 = scmp.ne.s32.totalorder %s116, %s130
      %p132 = scmp.eq.s32.totalorder %s22, 0
      %p133 = por %p131, %p132
      %s135 = sadd.s32 %s134, 1
      %p138 = scmp.eq.s32.totalorder %s16, 7
      %p139 = scmp.ne.s32.totalorder %s134, %s136
      %p140 = scmp.eq.s32.totalorder %s16, 0
      %p141 = por %p139, %p140
      %p142 = scmp.ne.s32.totalorder %s134, %s136
      %p143 = scmp.eq.s32.totalorder %s21, 7
      %p144 = por %p142, %p143
      %p145 = scmp.ne.s32.totalorder %s136, %s137
      %p146 = scmp.eq.s32.totalorder %s21, 0
      %p147 = por %p145, %p146
      %p148 = scmp.ne.s32.totalorder %s136, %s137
      %p149 = scmp.eq.s32.totalorder %s22, 7
      %p150 = por %p148, %p149
      %p152 = scmp.ne.s32.totalorder %s137, %s151
      %p153 = scmp.eq.s32.totalorder %s22, 0
      %p154 = por %p152, %p153
      %s156 = sadd.s32 %s155, 1
      %p159 = scmp.eq.s32.totalorder %s16, 7
      %p160 = scmp.ne.s32.totalorder %s155, %s157
      %p161 = scmp.eq.s32.totalorder %s16, 0
      %p162 = por %p160, %p161
      %p163 = scmp.ne.s32.totalorder %s155, %s157
      %p164 = scmp.eq.s32.totalorder %s21, 7
      %p165 = por %p163, %p164
      %p166 = scmp.ne.s32.totalorder %s157, %s158
      %p167 = scmp.eq.s32.totalorder %s21, 0
      %p168 = por %p166, %p167
      %p169 = scmp.ne.s32.totalorder %s157, %s158
      %p170 = scmp.eq.s32.totalorder %s22, 7
      %p171 = por %p169, %p170
      %p173 = scmp.ne.s32.totalorder %s158, %s172
      %p174 = scmp.eq.s32.totalorder %s22, 0
      %p175 = por %p173, %p174
      %s176 = ssub.s32 %s16, %s23
      %p177 = scmp.eq.s32.totalorder %s176, 0
      %s179 = sadd.s32 %s178, 1
      %s180 = scalar_select %p177, %s178, %s179
      %p183 = pneg %p177
      %p184 = scmp.eq.s32.totalorder %s16, 7
      %p185 = por %p183, %p184
      %p186 = scmp.ne.s32.totalorder %s178, %s181
      %p187 = scmp.eq.s32.totalorder %s16, 0
      %p188 = por %p186, %p187
      %p189 = scmp.ne.s32.totalorder %s178, %s181
      %p190 = scmp.eq.s32.totalorder %s21, 7
      %p191 = por %p189, %p190
      %p192 = scmp.ne.s32.totalorder %s181, %s182
      %p193 = scmp.eq.s32.totalorder %s21, 0
      %p194 = por %p192, %p193
      %p195 = scmp.ne.s32.totalorder %s181, %s182
      %p196 = scmp.eq.s32.totalorder %s22, 7
      %p197 = por %p195, %p196
      %p199 = scmp.ne.s32.totalorder %s182, %s198
      %p200 = scmp.eq.s32.totalorder %s22, 0
      %p201 = por %p199, %p200
      %p202 = scmp.le.s32.totalorder 1, %s16
      %p203 = scmp.lt.s32.totalorder %s16, 9
      %p204 = pnand %p202, %p203
      %p205 = pneg %p204
      // Predicated region
      $region9: #{decoder_forward.1} parent=5 // pred_check
        _
      $region10: #{decoder_forward.1} parent=5 // pred_check_branch
        %207 = sbr.rel (%p204) target = $region12
      $region11: #{decoder_forward.1} parent=5 // pred_region
        %s208 = ssub.s32 %s16, 1
        // Predicated region
        $region13: #{decoder_forward.1} parent=11 // pred_check
          %p209 = pneg %p63
        $region14: #{decoder_forward.1} parent=11 // pred_check_branch
          %211 = sbr.rel (%p209) target = $region16
        $region15: #{decoder_forward.1} parent=11 // pred_region
          _
        $region16: #{decoder_forward.1} parent=11 // pred_fallthru
          _
        // Predicated region
        $region17: #{decoder_forward.1} parent=11 // pred_check
          %p212 = pneg %p84
        $region18: #{decoder_forward.1} parent=11 // pred_check_branch
          %214 = sbr.rel (%p212) target = $region20
        $region19: #{decoder_forward.1} parent=11 // pred_region
          _
        $region20: #{decoder_forward.1} parent=11 // pred_fallthru
          _
        // Predicated region
        $region21: #{decoder_forward.1} parent=11 // pred_check
          %p215 = pneg %p105
        $region22: #{decoder_forward.1} parent=11 // pred_check_branch
          %217 = sbr.rel (%p215) target = $region24
        $region23: #{decoder_forward.1} parent=11 // pred_region
          _
        $region24: #{decoder_forward.1} parent=11 // pred_fallthru
          _
        // Predicated region
        $region25: #{decoder_forward.1} parent=11 // pred_check
          %p218 = pneg %p126
        $region26: #{decoder_forward.1} parent=11 // pred_check_branch
          %220 = sbr.rel (%p218) target = $region28
        $region27: #{decoder_forward.1} parent=11 // pred_region
          _
        $region28: #{decoder_forward.1} parent=11 // pred_fallthru
          _
        // Predicated region
        $region29: #{decoder_forward.1} parent=11 // pred_check
          %p221 = pneg %p147
        $region30: #{decoder_forward.1} parent=11 // pred_check_branch
          %223 = sbr.rel (%p221) target = $region32
        $region31: #{decoder_forward.1} parent=11 // pred_region
          _
        $region32: #{decoder_forward.1} parent=11 // pred_fallthru
          _
        // Predicated region
        $region33: #{decoder_forward.1} parent=11 // pred_check
          %p224 = pneg %p168
        $region34: #{decoder_forward.1} parent=11 // pred_check_branch
          %226 = sbr.rel (%p224) target = $region36
        $region35: #{decoder_forward.1} parent=11 // pred_region
          _
        $region36: #{decoder_forward.1} parent=11 // pred_fallthru
          _
      $region12: #{decoder_forward.1} parent=5 // pred_fallthru
        _
      %p227 = scmp.lt.s32.totalorder %s16, 8
      // Predicated region
      $region37: #{decoder_forward.1} parent=5 // pred_check
        %p228 = pneg %p227
      $region38: #{decoder_forward.1} parent=5 // pred_check_branch
        %230 = sbr.rel (%p228) target = $region40
      $region39: #{decoder_forward.1} parent=5 // pred_region
        // Predicated region
        $region41: #{decoder_forward.1} parent=39 // pred_check
          %p231 = pneg %p36
        $region42: #{decoder_forward.1} parent=39 // pred_check_branch
          %233 = sbr.rel (%p231) target = $region44
        $region43: #{decoder_forward.1} parent=39 // pred_region
          %s234 = smul.u32 16, %s16
          %s235 = ssub.s32 125, %s234
          %p236 = scmp.lt.s32.totalorder %s235, 16
          %s237 = scalar_select %p236, %s235, 16
          %s238 = smul.u32 8, %s237
          %p239 = scmp.lt.s32.totalorder %s234, 124
          %s240 = scalar_select %p239, %s234, 124
          %s241 = smul.addr %s240, 8
          %s242 = scalar_lea.vmem %s0, %s241
          %s243 = smul.u32 16, %s16
          %s244 = ssub.s32 125, %s243
          %p245 = scmp.lt.s32.totalorder %s244, 16
          %s246 = scalar_select %p245, %s244, 16
          %s247 = smul.u32 8, %s246
        $region44: #{decoder_forward.1} parent=39 // pred_fallthru
          _
      $region40: #{decoder_forward.1} parent=5 // pred_fallthru
        _
      %p248 = scmp.le.s32.totalorder 1, %s16
      %p249 = scmp.lt.s32.totalorder %s16, 9
      %p250 = pnand %p248, %p249
      %p251 = pneg %p250
      // Predicated region
      $region45: #{decoder_forward.1} parent=5 // pred_check
        _
      $region46: #{decoder_forward.1} parent=5 // pred_check_branch
        %253 = sbr.rel (%p250) target = $region48
      $region47: #{decoder_forward.1} parent=5 // pred_region
        %s254 = ssub.s32 %s16, 1
        %s255 = smul.u32 16, %s21
        %s256 = ssub.s32 125, %s255
        %p257 = scmp.lt.s32.totalorder %s256, 16
        %s258 = scalar_select %p257, %s256, 16
        %s259 = smul.u32 8, %s258
        %p260 = scmp.lt.s32.totalorder %s255, 124
        %s261 = scalar_select %p260, %s255, 124
        %s262 = smul.addr %s261, 8
        %s263 = scalar_lea.vmem %s0, %s262
        %p264 = pneg %p42
        %p265 = pneg %p39
        %p266 = pneg %p63
        %p267 = pneg %p60
        %p268 = pneg %p84
        %p269 = pneg %p81
        %p270 = pneg %p105
        %p271 = pneg %p102
        %p272 = pneg %p126
        %p273 = pneg %p123
        %p274 = pneg %p147
        %p275 = pneg %p144
        %p276 = pneg %p168
        %p277 = pneg %p165
        %p278 = pneg %p194
        %p279 = pneg %p191
        %s280 = sand.u32 %s181, 1
        %s281 = scalar_lea.sflag [#allocation3], %s280
        %s282 = sand.u32 %s181, 1
        %s283 = smul.addr %s282, 8
        %s284 = scalar_lea.vmem [#allocation2], %s283
        %s285 = smul.u32 16, %s21
        %s286 = ssub.s32 125, %s285
        %p287 = scmp.lt.s32.totalorder %s286, 16
        %s288 = scalar_select %p287, %s286, 16
        %s289 = smul.u32 8, %s288
        %p290 = scmp.lt.s32.totalorder %s285, 124
        %s291 = scalar_select %p290, %s285, 124
        %s292 = smul.addr %s291, 8
        %s293 = scalar_lea.vmem %s0, %s292
        %s294 = smul.u32 16, %s21
        %s295 = ssub.s32 125, %s294
        %p296 = scmp.lt.s32.totalorder %s295, 16
        %s297 = scalar_select %p296, %s295, 16
        %s298 = smul.u32 8, %s297
        %v299 = vld [vmem:[%s293] sm:$0xff]
        %v300 = vld [vmem:[%s293 + $0x8] sm:$0xff]
        %v301 = vld [vmem:[%s293 + $0x10] sm:$0xff]
        %v302 = vld [vmem:[%s293 + $0x18] sm:$0xff]
        %v303 = vld [vmem:[%s293 + $0x20] sm:$0xff]
        %v304 = vld [vmem:[%s293 + $0x28] sm:$0xff]
        %v305 = vld [vmem:[%s293 + $0x30] sm:$0xff]
        %v306 = vld [vmem:[%s293 + $0x38] sm:$0xff]
        %v307 = vld [vmem:[%s293 + $0x40] sm:$0xff]
        %v308 = vld [vmem:[%s293 + $0x48] sm:$0xff]
        %v309 = vld [vmem:[%s293 + $0x50] sm:$0xff]
        %v310 = vld [vmem:[%s293 + $0x58] sm:$0xff]
        %v311 = vld [vmem:[%s293 + $0x60] sm:$0xff]
        %v312 = vld [vmem:[%s293 + $0x68] sm:$0xff]
        %v313 = vld [vmem:[%s293 + $0x70] sm:$0xff]
        %v314 = vld [vmem:[%s293 + $0x78] sm:$0xff]
        %v315 = vld [vmem:[%s1] sm:$0xff]
        %v316 = vld [vmem:[%s1 + $0x8] sm:$0xff]
        %v317 = vld [vmem:[%s1 + $0x10] sm:$0xff]
        %v318 = vld [vmem:[%s1 + $0x18] sm:$0xff]
        %v319 = vld [vmem:[%s2] sm:$0xff]
        %v320 = vld [vmem:[%s2 + $0x8] sm:$0xff]
        %v321 = vld [vmem:[%s2 + $0x10] sm:$0xff]
        %v322 = vld [vmem:[%s2 + $0x18] sm:$0xff]
        %324 = vset.pattern.permute.xlu0 0
        %325 = vperm.xlu0 %324, %v319
        %v326 = vpop.permute.xlu0 %325
        %329 = vset.pattern.permute.xlu0 0
        %330 = vperm.xlu0 %329, %v320
        %v331 = vpop.permute.xlu0 %330
        %334 = vset.pattern.permute.xlu0 0
        %335 = vperm.xlu0 %334, %v321
        %v336 = vpop.permute.xlu0 %335
        %339 = vset.pattern.permute.xlu0 0
        %340 = vperm.xlu0 %339, %v322
        %v341 = vpop.permute.xlu0 %340
        %vm343 = vcmask 261120
        %v345 = vsel %vm343, %v315, 0
        %v348 = vsel %vm343, %v316, 0
        %v351 = vsel %vm343, %v317, 0
        %v354 = vsel %vm343, %v318, 0
        %v357 = vsel %vm343, %v299, 0
        %v360 = vsel %vm343, %v300, 0
        %v363 = vsel %vm343, %v301, 0
        %v366 = vsel %vm343, %v302, 0
        %v369 = vsel %vm343, %v303, 0
        %v372 = vsel %vm343, %v304, 0
        %v375 = vsel %vm343, %v305, 0
        %v378 = vsel %vm343, %v306, 0
        %v381 = vsel %vm343, %v307, 0
        %v384 = vsel %vm343, %v308, 0
        %v387 = vsel %vm343, %v309, 0
        %v390 = vsel %vm343, %v310, 0
        %v393 = vsel %vm343, %v311, 0
        %v396 = vsel %vm343, %v312, 0
        %v399 = vsel %vm343, %v313, 0
        %v402 = vsel %vm343, %v314, 0
        %404 = vmatpush.xpose.msra.mxu0 %v402
        %405 = vmatpush.xpose.msra.mxu0 %v399
        %406 = vmatpush.xpose.msra.mxu0 %v396
        %407 = vmatpush.xpose.msra.mxu0 %v393
        %408 = vmatpush.xpose.msra.mxu0 %v390
        %409 = vmatpush.xpose.msra.mxu0 %v387
        %410 = vmatpush.xpose.msra.mxu0 %v384
        %411 = vmatpush.xpose.msra.mxu0 %v381
        %412 = vmatpush.xpose.msra.mxu0 %v378
        %413 = vmatpush.xpose.msra.mxu0 %v375
        %414 = vmatpush.xpose.msra.mxu0 %v372
        %415 = vmatpush.xpose.msra.mxu0 %v369
        %416 = vmatpush.xpose.msra.mxu0 %v366
        %417 = vmatpush.xpose.msra.mxu0 %v363
        %418 = vmatpush.xpose.msra.mxu0 %v360
        %419 = vmatpush.xpose.msra.mxu0 %v357
        %420 = vmatmul.f32.gmra.mxu0 %v345
        %v421 = vpop.f32.mrf.mxu0
        %v422 = vadd.f32 %v326, %v421
        %423 = vmatmul.f32.gmra.mxu0 %v348
        %v424 = vpop.f32.mrf.mxu0
        %v425 = vadd.f32 %v331, %v424
        %426 = vmatmul.f32.gmra.mxu0 %v351
        %v427 = vpop.f32.mrf.mxu0
        %v428 = vadd.f32 %v336, %v427
        %429 = vmatmul.f32.gmra.mxu0 %v354
        %v430 = vpop.f32.mrf.mxu0
        %v431 = vadd.f32 %v341, %v430
        %432 = vdwg.mxu0
        %v433 = vmax.f32 %v422, 0.0
        %v434 = vmax.f32 %v425, 0.0
        %v435 = vmax.f32 %v428, 0.0
        %v436 = vmax.f32 %v431, 0.0
        %v437 = vld [vmem:[%s3] sm:$0xff]
        %v438 = vld [vmem:[%s3 + $0x8] sm:$0xff]
        %v439 = vld [vmem:[%s3 + $0x10] sm:$0xff]
        %v440 = vld [vmem:[%s3 + $0x18] sm:$0xff]
        %v441 = vld [vmem:[%s4] sm:$0xff]
        %v442 = vld [vmem:[%s4 + $0x8] sm:$0xff]
        %v443 = vld [vmem:[%s4 + $0x10] sm:$0xff]
        %v444 = vld [vmem:[%s4 + $0x18] sm:$0xff]
        %446 = vset.pattern.permute.xlu0 0
        %447 = vperm.xlu0 %446, %v441
        %v448 = vpop.permute.xlu0 %447
        %451 = vset.pattern.permute.xlu0 0
        %452 = vperm.xlu0 %451, %v442
        %v453 = vpop.permute.xlu0 %452
        %456 = vset.pattern.permute.xlu0 0
        %457 = vperm.xlu0 %456, %v443
        %v458 = vpop.permute.xlu0 %457
        %461 = vset.pattern.permute.xlu0 0
        %462 = vperm.xlu0 %461, %v444
        %v463 = vpop.permute.xlu0 %462
        %v466 = vsel %vm343, %v437, 0
        %v469 = vsel %vm343, %v438, 0
        %v472 = vsel %vm343, %v439, 0
        %v475 = vsel %vm343, %v440, 0
        %477 = vmatpush.msra.mxu0 0.0
        %478 = vmatpush.msra.mxu0 0.0
        %479 = vmatpush.msra.mxu0 0.0
        %480 = vmatpush.msra.mxu0 0.0
        %481 = vmatpush.msra.mxu0 0.0
        %482 = vmatpush.msra.mxu0 0.0
        %483 = vmatpush.msra.mxu0 0.0
        %484 = vmatpush.msra.mxu0 0.0
        %485 = vmatpush.msra.mxu0 0.0
        %486 = vmatpush.msra.mxu0 0.0
        %487 = vmatpush.msra.mxu0 0.0
        %488 = vmatpush.msra.mxu0 0.0
        %489 = vmatpush.msra.mxu0 %v436
        %490 = vmatpush.msra.mxu0 %v435
        %491 = vmatpush.msra.mxu0 %v434
        %492 = vmatpush.msra.mxu0 %v433
        %493 = vmatmul.f32.gmra.mxu0 %v466
        %v494 = vpop.f32.mrf.mxu0
        %v495 = vadd.f32 %v448, %v494
        %496 = vmatmul.f32.gmra.mxu0 %v469
        %v497 = vpop.f32.mrf.mxu0
        %v498 = vadd.f32 %v453, %v497
        %499 = vmatmul.f32.gmra.mxu0 %v472
        %v500 = vpop.f32.mrf.mxu0
        %v501 = vadd.f32 %v458, %v500
        %502 = vmatmul.f32.gmra.mxu0 %v475
        %v503 = vpop.f32.mrf.mxu0
        %v504 = vadd.f32 %v463, %v503
        %505 = vdwg.mxu0
        %v506 = vmax.f32 %v495, 0.0
        %v507 = vmax.f32 %v498, 0.0
        %v508 = vmax.f32 %v501, 0.0
        %v509 = vmax.f32 %v504, 0.0
        %v510 = vld [vmem:[%s5] sm:$0xff]
        %v511 = vld [vmem:[%s6] sm:$0xff]
        %513 = vset.pattern.permute.xlu0 0
        %514 = vperm.xlu0 %513, %v511
        %v515 = vpop.permute.xlu0 %514
        %v518 = vsel %vm343, %v510, 0
        %520 = vmatpush.msra.mxu0 0.0
        %521 = vmatpush.msra.mxu0 0.0
        %522 = vmatpush.msra.mxu0 0.0
        %523 = vmatpush.msra.mxu0 0.0
        %524 = vmatpush.msra.mxu0 0.0
        %525 = vmatpush.msra.mxu0 0.0
        %526 = vmatpush.msra.mxu0 0.0
        %527 = vmatpush.msra.mxu0 0.0
        %528 = vmatpush.msra.mxu0 0.0
        %529 = vmatpush.msra.mxu0 0.0
        %530 = vmatpush.msra.mxu0 0.0
        %531 = vmatpush.msra.mxu0 0.0
        %532 = vmatpush.msra.mxu0 %v509
        %533 = vmatpush.msra.mxu0 %v508
        %534 = vmatpush.msra.mxu0 %v507
        %535 = vmatpush.msra.mxu0 %v506
        %536 = vmatmul.f32.gmra.mxu0 %v518
        %v537 = vpop.f32.mrf.mxu0
        %v538 = vadd.f32 %v515, %v537
        %539 = vdwg.mxu0
        %540 = vst [vmem:[%s284] sm:$0xff] %v538
        %s541 = sand.u32 %s181, 1
        %s542 = scalar_lea.sflag [#allocation3], %s541
        %s543 = sand.u32 %s181, 1
        %s544 = smul.addr %s543, 8
        %s545 = scalar_lea.vmem [#allocation2], %s544
        // Predicated region
        $region49: #{decoder_forward.1} parent=47 // pred_check
          %p546 = pneg %p191
        $region50: #{decoder_forward.1} parent=47 // pred_check_branch
          %548 = sbr.rel (%p546) target = $region52
        $region51: #{decoder_forward.1} parent=47 // pred_region
          %550 = vsyncadd %s542, 0
          %s551 = smul.addr %s21, 8
          %s552 = scalar_lea.hbm %s7, %s551
          %s554 = sshll.u32 %s545, 4
          %s555 = int_to_ptr.vmem [resolvable:$true] %s554
          %s556 = sshll.u32 %s552, 4
          %s557 = int_to_ptr.hbm [resolvable:$true] %s556
          %559 = dma.vmem_to_hbm [thread:$0]  %s555, 128, %s557, %s542
        $region52: #{decoder_forward.1} parent=47 // pred_fallthru
          _
      $region48: #{decoder_forward.1} parent=5 // pred_fallthru
        _
      %p560 = scmp.le.s32.totalorder 2, %s16
      // Predicated region
      $region53: #{decoder_forward.1} parent=5 // pred_check
        %p561 = pneg %p560
      $region54: #{decoder_forward.1} parent=5 // pred_check_branch
        %563 = sbr.rel (%p561) target = $region56
      $region55: #{decoder_forward.1} parent=5 // pred_region
        %s564 = ssub.s32 %s16, 2
        // Predicated region
        $region57: #{decoder_forward.1} parent=55 // pred_check
          %p565 = pneg %p197
        $region58: #{decoder_forward.1} parent=55 // pred_check_branch
          %567 = sbr.rel (%p565) target = $region60
        $region59: #{decoder_forward.1} parent=55 // pred_region
          %s568 = sand.u32 %s182, 1
          %s569 = scalar_lea.sflag [#allocation3], %s568
          %s570 = sand.u32 %s182, 1
          %s571 = smul.addr %s570, 8
          %s572 = scalar_lea.vmem [#allocation2], %s571
          %574 = dma.done %s569, 128
        $region60: #{decoder_forward.1} parent=55 // pred_fallthru
          _
      $region56: #{decoder_forward.1} parent=5 // pred_fallthru
        _
    $region6: #{decoder_forward.1} parent=1 // loop_footer
      %s20 = sadd.s32 1, %s16
    $region7: #{decoder_forward.1} parent=1 // loop_footer_branch
      %15 = sbr.rel target = $region3
    $region8: #{decoder_forward.1} parent=1 // loop_exit
      _
    %575 = vsyncpa [#allocation3], 1
    %s576 = scalar_lea.sflag [#allocation3], 1
    %577 = vsyncpa %s576, 1

</llo_original>
